<compile_context>
chip_gen: v5e
topology: v5e:2x2
jax: 0.10.0
libtpu: 0.0.40
codegen_flags: <defaults>
</compile_context>

<pallas_src>
import functools

import jax
import jax.numpy as jnp
from jax import lax
from jax.experimental import pallas as pl
from jax.experimental.pallas import tpu as pltpu

IN_DIM = 12
H1 = 64
H2 = 32
NUM_CLASSES = 3
OUT_ROWS = 8           # pad 3 output features -> 8 sublane rows (cheap, dense)
BN_EPS = 1e-5
TILE_N = 4096          # batch rows per grid step (multiple of 128)


def _round_up(x, m):
    return ((x + m - 1) // m) * m


def _choose_tile(n, tile_n):
    """Tile over the batch. Must be a multiple of 128 (lane-dense output block)."""
    n128 = _round_up(n, 128)
    if n128 <= tile_n:
        # Split moderate batches into >=2 steps so v7x can use both TensorCores.
        if n128 >= 1024:
            return _round_up((n128 + 1) // 2, 128)
        return n128
    return tile_n


def heightnet_kernel(x_ref, w1_ref, b1_ref, w2_ref, b2_ref, w3_ref, b3_ref, o_ref):
    # x tile: [tile_n, 12] f32 -> bf16 (VPU cast, free under the memory bound)
    x = x_ref[...].astype(jnp.bfloat16)

    # Linear(12 -> 64) + ReLU, feature-major result: h1[f, n].
    # Contract the feature dim of both operands (w1_t @ x^T), bf16 MXU, f32 acc.
    h = lax.dot_general(w1_ref[...], x,
                        dimension_numbers=(((1,), (1,)), ((), ())),
                        preferred_element_type=jnp.float32)        # [64, tile]
    h = jnp.maximum(h + b1_ref[...], 0.0)

    # BatchNorm1d(64) is folded into w2/b2 on the host. Dropout = identity (eval).

    # Linear(64 -> 32) + ReLU (feature-major).
    h = jnp.dot(w2_ref[...], h.astype(jnp.bfloat16),
                preferred_element_type=jnp.float32) + b2_ref[...]   # [32, tile]
    h = jnp.maximum(h, 0.0)

    # Linear(32 -> 3), padded to 8 output rows; (8, tile) lane-dense store.
    o_ref[...] = jnp.dot(w3_ref[...], h.astype(jnp.bfloat16),
                         preferred_element_type=jnp.float32) + b3_ref[...]


def prepare_params(params):
    """Fold BN into W2/b2, transpose to feature-major, pad W3/b3 to 8 rows, cast bf16."""
    (w1, b1, gamma, beta, mean, var, w2, b2, w3, b3) = params

    # BN (eval): y = (h - mean) * gamma / sqrt(var + eps) + beta = h * s + t
    inv = gamma / jnp.sqrt(var + BN_EPS)                       # [1, H1]
    s = inv.reshape(H1)
    t = (beta - mean * inv).reshape(1, H1)
    w2_f = s[:, None] * w2                                     # fold scale into W2 rows
    b2_f = t @ w2 + b2                                         # fold shift into b2

    # Feature-major (transposed) weights.
    w1_t = w1.T                                                # [H1, IN_DIM]
    w2_t = w2_f.T                                              # [H2, H1]
    w3_t = jnp.zeros((OUT_ROWS, H2), jnp.float32).at[:NUM_CLASSES, :].set(w3.T)
    b3_t = jnp.zeros((OUT_ROWS, 1), jnp.float32).at[:NUM_CLASSES, :].set(
        b3.reshape(NUM_CLASSES, 1))

    return (w1_t.astype(jnp.bfloat16), b1.reshape(H1, 1).astype(jnp.float32),
            w2_t.astype(jnp.bfloat16), b2_f.reshape(H2, 1).astype(jnp.float32),
            w3_t.astype(jnp.bfloat16), b3_t.astype(jnp.float32))


@functools.partial(jax.jit, static_argnames=("tile_n",))
def heightnet_forward(x, prepared, tile_n=TILE_N):
    w1, b1, w2, b2, w3, b3 = prepared
    N = x.shape[0]

    tile = _choose_tile(N, tile_n)
    n_pad = _round_up(N, tile)
    if n_pad != N:
        # Zero-pad only when needed (VMEM refs have no bounds check -> never read OOB).
        x = jnp.pad(x, ((0, n_pad - N), (0, 0)))

    grid = (n_pad // tile,)
    full = lambda shape: pl.BlockSpec(shape, lambda i: (0, 0))  # VMEM-resident params

    out = pl.pallas_call(
        heightnet_kernel,
        out_shape=jax.ShapeDtypeStruct((OUT_ROWS, n_pad), jnp.float32),
        grid=grid,
        in_specs=[
            pl.BlockSpec((tile, IN_DIM), lambda i: (i, 0)),     # x: tiled over batch
            full((H1, IN_DIM)), full((H1, 1)),                  # w1^T, b1
            full((H2, H1)),     full((H2, 1)),                  # w2^T (BN-folded), b2
            full((OUT_ROWS, H2)), full((OUT_ROWS, 1)),          # w3^T (row-padded), b3
        ],
        out_specs=pl.BlockSpec((OUT_ROWS, tile), lambda i: (0, i)),
        compiler_params=pltpu.CompilerParams(
            dimension_semantics=("parallel",)),
    )(x, w1, b1, w2, b2, w3, b3)

    # Cheap contiguous row slice of the feature-major output, then transpose back.
    return out[:NUM_CLASSES, :N].T


def init_params(key):
    ks = jax.random.split(key, 8)
    w1 = jax.random.normal(ks[0], (IN_DIM, H1), jnp.float32) * 0.1
    b1 = jax.random.normal(ks[1], (1, H1), jnp.float32) * 0.01
    gamma = jnp.ones((1, H1), jnp.float32)
    beta = jnp.zeros((1, H1), jnp.float32)
    mean = jax.random.normal(ks[2], (1, H1), jnp.float32) * 0.05
    var = jnp.abs(jax.random.normal(ks[3], (1, H1), jnp.float32)) * 0.1 + 1.0
    w2 = jax.random.normal(ks[4], (H1, H2), jnp.float32) * 0.1
    b2 = jax.random.normal(ks[5], (1, H2), jnp.float32) * 0.01
    w3 = jax.random.normal(ks[6], (H2, NUM_CLASSES), jnp.float32) * 0.1
    b3 = jax.random.normal(ks[7], (1, NUM_CLASSES), jnp.float32) * 0.01
    return (w1, b1, gamma, beta, mean, var, w2, b2, w3, b3)


def reference_forward_prepared(x, prepared):
    """f32 reference using the same bf16-quantized / BN-folded params as the kernel."""
    w1_t, b1, w2_t, b2, w3_t, b3 = prepared
    xq = x.astype(jnp.bfloat16).astype(jnp.float32)
    h = jnp.maximum(xq @ w1_t.astype(jnp.float32).T + b1.reshape(1, -1), 0.0)
    h = h.astype(jnp.bfloat16).astype(jnp.float32)
    h = jnp.maximum(h @ w2_t.astype(jnp.float32).T + b2.reshape(1, -1), 0.0)
    h = h.astype(jnp.bfloat16).astype(jnp.float32)
    out = h @ w3_t.astype(jnp.float32).T + b3.reshape(1, -1)
    return out[:, :NUM_CLASSES]


def reference_forward_f32(x, params):
    """Original (unfolded, f32) pipeline, for a semantic sanity check."""
    (w1, b1, gamma, beta, mean, var, w2, b2, w3, b3) = params
    h = jnp.maximum(x @ w1 + b1, 0.0)
    h = (h - mean) / jnp.sqrt(var + BN_EPS) * gamma + beta
    h = jnp.maximum(h @ w2 + b2, 0.0)
    return h @ w3 + b3


if __name__ == "__main__":
    key = jax.random.PRNGKey(0)
    k_x, k_p = jax.random.split(key)

    N = 300  # deliberately not a multiple of 8 / 128 -> exercises the padding path
    x = jax.random.normal(k_x, (N, IN_DIM), jnp.float32)
    params = init_params(k_p)
    prepared = prepare_params(params)

    out = heightnet_forward(x, prepared)
    out = jax.block_until_ready(out)
    assert out.shape == (N, NUM_CLASSES)

    # Tight check vs. a reference using the exact same quantized/folded params.
    ref_q = reference_forward_prepared(x, prepared)
    assert jnp.allclose(out, ref_q, atol=2e-3, rtol=2e-3), "mismatch vs quantized reference"

    # Loose check vs. the original full-f32 pipeline (bf16 quantization error only).
    ref_f32 = reference_forward_f32(x, params)
    assert jnp.allclose(out, ref_f32, atol=3e-2, rtol=3e-2), "mismatch vs f32 reference"

    print("KERNEL_OK")
</pallas_src>

<mosaic_0001>
module attributes {stable_mosaic.version = 11 : i64} {
  func.func @heightnet_kernel(%arg0: i32, %arg1: memref<384x12xf32, #tpu.memory_space<vmem>>, %arg2: memref<64x12xbf16, #tpu.memory_space<vmem>>, %arg3: memref<64x1xf32, #tpu.memory_space<vmem>>, %arg4: memref<32x64xbf16, #tpu.memory_space<vmem>>, %arg5: memref<32x1xf32, #tpu.memory_space<vmem>>, %arg6: memref<8x32xbf16, #tpu.memory_space<vmem>>, %arg7: memref<8x1xf32, #tpu.memory_space<vmem>>, %arg8: memref<8x384xf32, #tpu.memory_space<vmem>>) attributes {dimension_semantics = [#tpu.dimension_semantics<parallel>], iteration_bounds = array<i64: 1>, scalar_prefetch = 0 : i64, scratch_operands = 0 : i64, tpu.core_type = #tpu.core_type<tc>, window_params = [{transform_indices = @transform_0, window_bounds = array<i64: 384, 12>}, {pipeline_mode = #tpu.pipeline_mode<synchronous>, transform_indices = @transform_1, window_bounds = array<i64: 64, 12>}, {pipeline_mode = #tpu.pipeline_mode<synchronous>, transform_indices = @transform_2, window_bounds = array<i64: 64, 1>}, {pipeline_mode = #tpu.pipeline_mode<synchronous>, transform_indices = @transform_3, window_bounds = array<i64: 32, 64>}, {pipeline_mode = #tpu.pipeline_mode<synchronous>, transform_indices = @transform_4, window_bounds = array<i64: 32, 1>}, {pipeline_mode = #tpu.pipeline_mode<synchronous>, transform_indices = @transform_5, window_bounds = array<i64: 8, 32>}, {pipeline_mode = #tpu.pipeline_mode<synchronous>, transform_indices = @transform_6, window_bounds = array<i64: 8, 1>}, {transform_indices = @transform_7, window_bounds = array<i64: 8, 384>}]} {
    %c0 = arith.constant 0 : index
    %c0_0 = arith.constant 0 : index
    %0 = vector.load %arg1[%c0, %c0_0] : memref<384x12xf32, #tpu.memory_space<vmem>>, vector<384x12xf32>
    %1 = arith.truncf %0 : vector<384x12xf32> to vector<384x12xbf16>
    %c0_1 = arith.constant 0 : index
    %c0_2 = arith.constant 0 : index
    %2 = vector.load %arg2[%c0_1, %c0_2] : memref<64x12xbf16, #tpu.memory_space<vmem>>, vector<64x12xbf16>
    %cst = arith.constant dense<0.000000e+00> : vector<64x384xf32>
    %3 = tpu.matmul %2, %1, %cst {dimension_numbers = #tpu.dot_dimension_numbers<[1], [1], [0], [0], [0, 0, 1, 0], [], []>} : vector<64x12xbf16>, vector<384x12xbf16>, vector<64x384xf32> -> vector<64x384xf32>
    %c0_3 = arith.constant 0 : index
    %c0_4 = arith.constant 0 : index
    %4 = vector.load %arg3[%c0_3, %c0_4] : memref<64x1xf32, #tpu.memory_space<vmem>>, vector<64x1xf32>
    %5 = vector.broadcast %4 : vector<64x1xf32> to vector<64x384xf32>
    %6 = arith.addf %3, %5 : vector<64x384xf32>
    %cst_5 = arith.constant 0.000000e+00 : f32
    %7 = vector.broadcast %cst_5 : f32 to vector<64x384xf32>
    %8 = arith.maximumf %6, %7 : vector<64x384xf32>
    %c0_6 = arith.constant 0 : index
    %c0_7 = arith.constant 0 : index
    %9 = vector.load %arg4[%c0_6, %c0_7] : memref<32x64xbf16, #tpu.memory_space<vmem>>, vector<32x64xbf16>
    %10 = arith.truncf %8 : vector<64x384xf32> to vector<64x384xbf16>
    %cst_8 = arith.constant dense<0.000000e+00> : vector<32x384xf32>
    %11 = tpu.matmul %9, %10, %cst_8 {dimension_numbers = #tpu.dot_dimension_numbers<[1], [0], [0], [1], [0, 0, 1, 1], [], []>} : vector<32x64xbf16>, vector<64x384xbf16>, vector<32x384xf32> -> vector<32x384xf32>
    %c0_9 = arith.constant 0 : index
    %c0_10 = arith.constant 0 : index
    %12 = vector.load %arg5[%c0_9, %c0_10] : memref<32x1xf32, #tpu.memory_space<vmem>>, vector<32x1xf32>
    %13 = vector.broadcast %12 : vector<32x1xf32> to vector<32x384xf32>
    %14 = arith.addf %11, %13 : vector<32x384xf32>
    %cst_11 = arith.constant 0.000000e+00 : f32
    %15 = vector.broadcast %cst_11 : f32 to vector<32x384xf32>
    %16 = arith.maximumf %14, %15 : vector<32x384xf32>
    %c0_12 = arith.constant 0 : index
    %c0_13 = arith.constant 0 : index
    %17 = vector.load %arg6[%c0_12, %c0_13] : memref<8x32xbf16, #tpu.memory_space<vmem>>, vector<8x32xbf16>
    %18 = arith.truncf %16 : vector<32x384xf32> to vector<32x384xbf16>
    %cst_14 = arith.constant dense<0.000000e+00> : vector<8x384xf32>
    %19 = tpu.matmul %17, %18, %cst_14 {dimension_numbers = #tpu.dot_dimension_numbers<[1], [0], [0], [1], [0, 0, 1, 1], [], []>} : vector<8x32xbf16>, vector<32x384xbf16>, vector<8x384xf32> -> vector<8x384xf32>
    %c0_15 = arith.constant 0 : index
    %c0_16 = arith.constant 0 : index
    %20 = vector.load %arg7[%c0_15, %c0_16] : memref<8x1xf32, #tpu.memory_space<vmem>>, vector<8x1xf32>
    %21 = vector.broadcast %20 : vector<8x1xf32> to vector<8x384xf32>
    %22 = arith.addf %19, %21 : vector<8x384xf32>
    %c0_17 = arith.constant 0 : index
    %c0_18 = arith.constant 0 : index
    %23 = vector.load %arg8[%c0_17, %c0_18] : memref<8x384xf32, #tpu.memory_space<vmem>>, vector<8x384xf32>
    tpu.vector_store %arg8[%c0_17, %c0_18], %22 {strides = array<i32>} : memref<8x384xf32, #tpu.memory_space<vmem>>, vector<8x384xf32>,
    return
  }
  func.func @transform_0(%arg0: i32) -> (i32, i32) {
    %c0_i32 = arith.constant 0 : i32
    %c0_i32_0 = arith.constant 0 : i32
    return %arg0, %c0_i32 : i32, i32
  }
  func.func @transform_1(%arg0: i32) -> (i32, i32) {
    %c0_i32 = arith.constant 0 : i32
    %c0_i32_0 = arith.constant 0 : i32
    %c0_i32_1 = arith.constant 0 : i32
    return %c0_i32, %c0_i32_0 : i32, i32
  }
  func.func @transform_2(%arg0: i32) -> (i32, i32) {
    %c0_i32 = arith.constant 0 : i32
    %c0_i32_0 = arith.constant 0 : i32
    %c0_i32_1 = arith.constant 0 : i32
    return %c0_i32, %c0_i32_0 : i32, i32
  }
  func.func @transform_3(%arg0: i32) -> (i32, i32) {
    %c0_i32 = arith.constant 0 : i32
    %c0_i32_0 = arith.constant 0 : i32
    %c0_i32_1 = arith.constant 0 : i32
    return %c0_i32, %c0_i32_0 : i32, i32
  }
  func.func @transform_4(%arg0: i32) -> (i32, i32) {
    %c0_i32 = arith.constant 0 : i32
    %c0_i32_0 = arith.constant 0 : i32
    %c0_i32_1 = arith.constant 0 : i32
    return %c0_i32, %c0_i32_0 : i32, i32
  }
  func.func @transform_5(%arg0: i32) -> (i32, i32) {
    %c0_i32 = arith.constant 0 : i32
    %c0_i32_0 = arith.constant 0 : i32
    %c0_i32_1 = arith.constant 0 : i32
    return %c0_i32, %c0_i32_0 : i32, i32
  }
  func.func @transform_6(%arg0: i32) -> (i32, i32) {
    %c0_i32 = arith.constant 0 : i32
    %c0_i32_0 = arith.constant 0 : i32
    %c0_i32_1 = arith.constant 0 : i32
    return %c0_i32, %c0_i32_0 : i32, i32
  }
  func.func @transform_7(%arg0: i32) -> (i32, i32) {
    %c0_i32 = arith.constant 0 : i32
    %c0_i32_0 = arith.constant 0 : i32
    return %c0_i32, %arg0 : i32, i32
  }
}

</mosaic_0001>

<llo_original>
// kernel: heightnet_forward.1
$region0: #{heightnet_forward.1}
  #allocation0 [shape = 'u32[]', space=smem, size = 0x4, offset = 0x4, fixed_abs, tag = 'smem constant byte address 0x4 - core index']
  #allocation1 [shape = 'u32[72,128]{1,0:T(1,128)}', space=vmem, size = 0x9000, scoped, tag = 'internal scratch']
  %s0 = inlined_call_operand.vmem [shape: f32[384,12], index: 0, kind: input, shape index: {}]
  %s1 = inlined_call_operand.vmem [shape: bf16[64,12], index: 1, kind: input, shape index: {}]
  %s2 = inlined_call_operand.vmem [shape: f32[64,1], index: 2, kind: input, shape index: {}]
  %s3 = inlined_call_operand.vmem [shape: bf16[32,64], index: 3, kind: input, shape index: {}]
  %s4 = inlined_call_operand.vmem [shape: f32[32,1], index: 4, kind: input, shape index: {}]
  %s5 = inlined_call_operand.vmem [shape: bf16[8,32], index: 5, kind: input, shape index: {}]
  %s6 = inlined_call_operand.vmem [shape: f32[8,1], index: 6, kind: input, shape index: {}]
  %s7 = inlined_call_operand.vmem [shape: f32[8,384], index: 7, kind: output, shape index: {}]
  %s8 = sld [smem:[#allocation0]]
  $region38: #{heightnet_forward.1} parent=0
    _
  %s10 = ssub.s32 1, %s8
  %s11 = scalar_select 0, %s10, %s8
  // Predicated region
  $region2: #{heightnet_forward.1} parent=0 // pred_check
    _
  $region3: #{heightnet_forward.1} parent=0 // pred_check_branch
    %13 = sbr.rel (0) target = $region5
  $region4: #{heightnet_forward.1} parent=0 // pred_region
    _
  $region5: #{heightnet_forward.1} parent=0 // pred_fallthru
    _
  // Predicated region
  $region6: #{heightnet_forward.1} parent=0 // pred_check
    _
  $region7: #{heightnet_forward.1} parent=0 // pred_check_branch
    %15 = sbr.rel (0) target = $region9
  $region8: #{heightnet_forward.1} parent=0 // pred_region
    _
  $region9: #{heightnet_forward.1} parent=0 // pred_fallthru
    _
  // Predicated region
  $region10: #{heightnet_forward.1} parent=0 // pred_check
    _
  $region11: #{heightnet_forward.1} parent=0 // pred_check_branch
    %17 = sbr.rel (0) target = $region13
  $region12: #{heightnet_forward.1} parent=0 // pred_region
    _
  $region13: #{heightnet_forward.1} parent=0 // pred_fallthru
    _
  // Predicated region
  $region14: #{heightnet_forward.1} parent=0 // pred_check
    _
  $region15: #{heightnet_forward.1} parent=0 // pred_check_branch
    %19 = sbr.rel (0) target = $region17
  $region16: #{heightnet_forward.1} parent=0 // pred_region
    _
  $region17: #{heightnet_forward.1} parent=0 // pred_fallthru
    _
  // Predicated region
  $region18: #{heightnet_forward.1} parent=0 // pred_check
    _
  $region19: #{heightnet_forward.1} parent=0 // pred_check_branch
    %21 = sbr.rel (0) target = $region21
  $region20: #{heightnet_forward.1} parent=0 // pred_region
    _
  $region21: #{heightnet_forward.1} parent=0 // pred_fallthru
    _
  // Predicated region
  $region22: #{heightnet_forward.1} parent=0 // pred_check
    _
  $region23: #{heightnet_forward.1} parent=0 // pred_check_branch
    %23 = sbr.rel (0) target = $region25
  $region24: #{heightnet_forward.1} parent=0 // pred_region
    _
  $region25: #{heightnet_forward.1} parent=0 // pred_fallthru
    _
  // Predicated region
  $region26: #{heightnet_forward.1} parent=0 // pred_check
    _
  $region27: #{heightnet_forward.1} parent=0 // pred_check_branch
    %25 = sbr.rel (0) target = $region29
  $region28: #{heightnet_forward.1} parent=0 // pred_region
    _
  $region29: #{heightnet_forward.1} parent=0 // pred_fallthru
    _
  %v27 = vld [vmem:[%s0] sm:$0xff]
  %v28 = vld [vmem:[%s0 + $0x8] sm:$0xff]
  %v29 = vld [vmem:[%s0 + $0x10] sm:$0xff]
  %v30 = vld [vmem:[%s0 + $0x18] sm:$0xff]
  %v31 = vld [vmem:[%s0 + $0x20] sm:$0xff]
  %v32 = vld [vmem:[%s0 + $0x28] sm:$0xff]
  %v33 = vld [vmem:[%s0 + $0x30] sm:$0xff]
  %v34 = vld [vmem:[%s0 + $0x38] sm:$0xff]
  %v35 = vld [vmem:[%s0 + $0x40] sm:$0xff]
  %v36 = vld [vmem:[%s0 + $0x48] sm:$0xff]
  %v37 = vld [vmem:[%s0 + $0x50] sm:$0xff]
  %v38 = vld [vmem:[%s0 + $0x58] sm:$0xff]
  %v39 = vld [vmem:[%s0 + $0x60] sm:$0xff]
  %v40 = vld [vmem:[%s0 + $0x68] sm:$0xff]
  %v41 = vld [vmem:[%s0 + $0x70] sm:$0xff]
  %v42 = vld [vmem:[%s0 + $0x78] sm:$0xff]
  %v43 = vld [vmem:[%s0 + $0x80] sm:$0xff]
  %v44 = vld [vmem:[%s0 + $0x88] sm:$0xff]
  %v45 = vld [vmem:[%s0 + $0x90] sm:$0xff]
  %v46 = vld [vmem:[%s0 + $0x98] sm:$0xff]
  %v47 = vld [vmem:[%s0 + $0xa0] sm:$0xff]
  %v48 = vld [vmem:[%s0 + $0xa8] sm:$0xff]
  %v49 = vld [vmem:[%s0 + $0xb0] sm:$0xff]
  %v50 = vld [vmem:[%s0 + $0xb8] sm:$0xff]
  %v51 = vld [vmem:[%s0 + $0xc0] sm:$0xff]
  %v52 = vld [vmem:[%s0 + $0xc8] sm:$0xff]
  %v53 = vld [vmem:[%s0 + $0xd0] sm:$0xff]
  %v54 = vld [vmem:[%s0 + $0xd8] sm:$0xff]
  %v55 = vld [vmem:[%s0 + $0xe0] sm:$0xff]
  %v56 = vld [vmem:[%s0 + $0xe8] sm:$0xff]
  %v57 = vld [vmem:[%s0 + $0xf0] sm:$0xff]
  %v58 = vld [vmem:[%s0 + $0xf8] sm:$0xff]
  %v59 = vld [vmem:[%s0 + $0x100] sm:$0xff]
  %v60 = vld [vmem:[%s0 + $0x108] sm:$0xff]
  %v61 = vld [vmem:[%s0 + $0x110] sm:$0xff]
  %v62 = vld [vmem:[%s0 + $0x118] sm:$0xff]
  %v63 = vld [vmem:[%s0 + $0x120] sm:$0xff]
  %v64 = vld [vmem:[%s0 + $0x128] sm:$0xff]
  %v65 = vld [vmem:[%s0 + $0x130] sm:$0xff]
  %v66 = vld [vmem:[%s0 + $0x138] sm:$0xff]
  %v67 = vld [vmem:[%s0 + $0x140] sm:$0xff]
  %v68 = vld [vmem:[%s0 + $0x148] sm:$0xff]
  %v69 = vld [vmem:[%s0 + $0x150] sm:$0xff]
  %v70 = vld [vmem:[%s0 + $0x158] sm:$0xff]
  %v71 = vld [vmem:[%s0 + $0x160] sm:$0xff]
  %v72 = vld [vmem:[%s0 + $0x168] sm:$0xff]
  %v73 = vld [vmem:[%s0 + $0x170] sm:$0xff]
  %v74 = vld [vmem:[%s0 + $0x178] sm:$0xff]
  %v75 = vpack.c.bf16 %v28, %v27
  %v76 = vpack.c.bf16 %v30, %v29
  %v77 = vpack.c.bf16 %v32, %v31
  %v78 = vpack.c.bf16 %v34, %v33
  %v79 = vpack.c.bf16 %v36, %v35
  %v80 = vpack.c.bf16 %v38, %v37
  %v81 = vpack.c.bf16 %v40, %v39
  %v82 = vpack.c.bf16 %v42, %v41
  %v83 = vpack.c.bf16 %v44, %v43
  %v84 = vpack.c.bf16 %v46, %v45
  %v85 = vpack.c.bf16 %v48, %v47
  %v86 = vpack.c.bf16 %v50, %v49
  %v87 = vpack.c.bf16 %v52, %v51
  %v88 = vpack.c.bf16 %v54, %v53
  %v89 = vpack.c.bf16 %v56, %v55
  %v90 = vpack.c.bf16 %v58, %v57
  %v91 = vpack.c.bf16 %v60, %v59
  %v92 = vpack.c.bf16 %v62, %v61
  %v93 = vpack.c.bf16 %v64, %v63
  %v94 = vpack.c.bf16 %v66, %v65
  %v95 = vpack.c.bf16 %v68, %v67
  %v96 = vpack.c.bf16 %v70, %v69
  %v97 = vpack.c.bf16 %v72, %v71
  %v98 = vpack.c.bf16 %v74, %v73
  %v99 = vld [vmem:[%s1] sm:$0xf]
  %v100 = vld [vmem:[%s1 + $0x4] sm:$0xf]
  %v101 = vld [vmem:[%s1 + $0x8] sm:$0xf]
  %v102 = vld [vmem:[%s1 + $0xc] sm:$0xf]
  %v103 = vld [vmem:[%s1 + $0x10] sm:$0xf]
  %v104 = vld [vmem:[%s1 + $0x14] sm:$0xf]
  %v105 = vld [vmem:[%s1 + $0x18] sm:$0xf]
  %v106 = vld [vmem:[%s1 + $0x1c] sm:$0xf]
  %v107 = vld [vmem:[%s2] sm:$0xff]
  %v108 = vld [vmem:[%s2 + $0x8] sm:$0xff]
  %v109 = vld [vmem:[%s2 + $0x10] sm:$0xff]
  %v110 = vld [vmem:[%s2 + $0x18] sm:$0xff]
  %v111 = vld [vmem:[%s2 + $0x20] sm:$0xff]
  %v112 = vld [vmem:[%s2 + $0x28] sm:$0xff]
  %v113 = vld [vmem:[%s2 + $0x30] sm:$0xff]
  %v114 = vld [vmem:[%s2 + $0x38] sm:$0xff]
  %116 = vset.pattern.permute.xlu0 0
  %117 = vperm.xlu0 %116, %v107
  %v118 = vpop.permute.xlu0 %117
  %121 = vset.pattern.permute.xlu0 0
  %122 = vperm.xlu0 %121, %v108
  %v123 = vpop.permute.xlu0 %122
  %126 = vset.pattern.permute.xlu0 0
  %127 = vperm.xlu0 %126, %v109
  %v128 = vpop.permute.xlu0 %127
  %131 = vset.pattern.permute.xlu0 0
  %132 = vperm.xlu0 %131, %v110
  %v133 = vpop.permute.xlu0 %132
  %136 = vset.pattern.permute.xlu0 0
  %137 = vperm.xlu0 %136, %v111
  %v138 = vpop.permute.xlu0 %137
  %141 = vset.pattern.permute.xlu0 0
  %142 = vperm.xlu0 %141, %v112
  %v143 = vpop.permute.xlu0 %142
  %146 = vset.pattern.permute.xlu0 0
  %147 = vperm.xlu0 %146, %v113
  %v148 = vpop.permute.xlu0 %147
  %151 = vset.pattern.permute.xlu0 0
  %152 = vperm.xlu0 %151, %v114
  %v153 = vpop.permute.xlu0 %152
  %v163 = vunpack.c.l.b16 %v99
  %v164 = vunpack.c.l.b16 %v100
  %v165 = vunpack.c.l.b16 %v101
  %v166 = vunpack.c.l.b16 %v102
  %v167 = vunpack.c.l.b16 %v103
  %v168 = vunpack.c.l.b16 %v104
  %v169 = vunpack.c.l.b16 %v105
  %v170 = vunpack.c.l.b16 %v106
  %v171 = vpack.c.b16 %v164, %v163
  %v172 = vpack.c.b16 %v166, %v165
  %v173 = vpack.c.b16 %v168, %v167
  %v174 = vpack.c.b16 %v170, %v169
  %vm175 = vcmask 97280
  %v177 = vsel %vm175, %v171, 0
  %v180 = vsel %vm175, %v172, 0
  %v183 = vsel %vm175, %v173, 0
  %v186 = vsel %vm175, %v174, 0
  %v189 = vsel %vm175, %v75, 0
  %v192 = vsel %vm175, %v76, 0
  %v195 = vsel %vm175, %v77, 0
  %v198 = vsel %vm175, %v78, 0
  %v201 = vsel %vm175, %v79, 0
  %v204 = vsel %vm175, %v80, 0
  %v207 = vsel %vm175, %v81, 0
  %v210 = vsel %vm175, %v82, 0
  %v213 = vsel %vm175, %v83, 0
  %v216 = vsel %vm175, %v84, 0
  %v219 = vsel %vm175, %v85, 0
  %v222 = vsel %vm175, %v86, 0
  %v225 = vsel %vm175, %v87, 0
  %v228 = vsel %vm175, %v88, 0
  %v231 = vsel %vm175, %v89, 0
  %v234 = vsel %vm175, %v90, 0
  %v237 = vsel %vm175, %v91, 0
  %v240 = vsel %vm175, %v92, 0
  %v243 = vsel %vm175, %v93, 0
  %v246 = vsel %vm175, %v94, 0
  %v249 = vsel %vm175, %v95, 0
  %v252 = vsel %vm175, %v96, 0
  %v255 = vsel %vm175, %v97, 0
  %v258 = vsel %vm175, %v98, 0
  %260 = vmatpush.bf16.xpose.msra.mxu0 %v210
  %261 = vmatpush.bf16.xpose.msra.mxu0 %v207
  %262 = vmatpush.bf16.xpose.msra.mxu0 %v204
  %263 = vmatpush.bf16.xpose.msra.mxu0 %v201
  %264 = vmatpush.bf16.xpose.msra.mxu0 %v198
  %265 = vmatpush.bf16.xpose.msra.mxu0 %v195
  %266 = vmatpush.bf16.xpose.msra.mxu0 %v192
  %267 = vmatpush.bf16.xpose.msra.mxu0 %v189
  %268 = vmatmul.bf16.gmra.mxu0 %v177
  %v269 = vpop.f32.mrf.mxu0
  %v270 = vadd.f32 %v118, %v269
  %v271 = vpop.f32.mrf.mxu0
  %v272 = vadd.f32 %v123, %v271
  %273 = vmatmul.bf16.gmra.mxu0 %v180
  %v274 = vpop.f32.mrf.mxu0
  %v275 = vadd.f32 %v128, %v274
  %v276 = vpop.f32.mrf.mxu0
  %v277 = vadd.f32 %v133, %v276
  %278 = vmatmul.bf16.gmra.mxu0 %v183
  %v279 = vpop.f32.mrf.mxu0
  %v280 = vadd.f32 %v138, %v279
  %v281 = vpop.f32.mrf.mxu0
  %v282 = vadd.f32 %v143, %v281
  %283 = vmatmul.bf16.gmra.mxu0 %v186
  %v284 = vpop.f32.mrf.mxu0
  %v285 = vadd.f32 %v148, %v284
  %v286 = vpop.f32.mrf.mxu0
  %v287 = vadd.f32 %v153, %v286
  %288 = vdwg.mxu0
  %289 = vmatpush.bf16.xpose.msra.mxu0 %v234
  %290 = vmatpush.bf16.xpose.msra.mxu0 %v231
  %291 = vmatpush.bf16.xpose.msra.mxu0 %v228
  %292 = vmatpush.bf16.xpose.msra.mxu0 %v225
  %293 = vmatpush.bf16.xpose.msra.mxu0 %v222
  %294 = vmatpush.bf16.xpose.msra.mxu0 %v219
  %295 = vmatpush.bf16.xpose.msra.mxu0 %v216
  %296 = vmatpush.bf16.xpose.msra.mxu0 %v213
  %297 = vmatmul.bf16.gmra.mxu0 %v177
  %v298 = vpop.f32.mrf.mxu0
  %v299 = vadd.f32 %v118, %v298
  %v300 = vpop.f32.mrf.mxu0
  %v301 = vadd.f32 %v123, %v300
  %302 = vmatmul.bf16.gmra.mxu0 %v180
  %v303 = vpop.f32.mrf.mxu0
  %v304 = vadd.f32 %v128, %v303
  %v305 = vpop.f32.mrf.mxu0
  %v306 = vadd.f32 %v133, %v305
  %307 = vmatmul.bf16.gmra.mxu0 %v183
  %v308 = vpop.f32.mrf.mxu0
  %v309 = vadd.f32 %v138, %v308
  %v310 = vpop.f32.mrf.mxu0
  %v311 = vadd.f32 %v143, %v310
  %312 = vmatmul.bf16.gmra.mxu0 %v186
  %v313 = vpop.f32.mrf.mxu0
  %v314 = vadd.f32 %v148, %v313
  %v315 = vpop.f32.mrf.mxu0
  %v316 = vadd.f32 %v153, %v315
  %317 = vdwg.mxu0
  %318 = vmatpush.bf16.xpose.msra.mxu0 %v258
  %319 = vmatpush.bf16.xpose.msra.mxu0 %v255
  %320 = vmatpush.bf16.xpose.msra.mxu0 %v252
  %321 = vmatpush.bf16.xpose.msra.mxu0 %v249
  %322 = vmatpush.bf16.xpose.msra.mxu0 %v246
  %323 = vmatpush.bf16.xpose.msra.mxu0 %v243
  %324 = vmatpush.bf16.xpose.msra.mxu0 %v240
  %325 = vmatpush.bf16.xpose.msra.mxu0 %v237
  %326 = vmatmul.bf16.gmra.mxu0 %v177
  %v327 = vpop.f32.mrf.mxu0
  %v328 = vadd.f32 %v118, %v327
  %v329 = vpop.f32.mrf.mxu0
  %v330 = vadd.f32 %v123, %v329
  %331 = vmatmul.bf16.gmra.mxu0 %v180
  %v332 = vpop.f32.mrf.mxu0
  %v333 = vadd.f32 %v128, %v332
  %v334 = vpop.f32.mrf.mxu0
  %v335 = vadd.f32 %v133, %v334
  %336 = vmatmul.bf16.gmra.mxu0 %v183
  %v337 = vpop.f32.mrf.mxu0
  %v338 = vadd.f32 %v138, %v337
  %v339 = vpop.f32.mrf.mxu0
  %v340 = vadd.f32 %v143, %v339
  %341 = vmatmul.bf16.gmra.mxu0 %v186
  %v342 = vpop.f32.mrf.mxu0
  %v343 = vadd.f32 %v148, %v342
  %v344 = vpop.f32.mrf.mxu0
  %v345 = vadd.f32 %v153, %v344
  %346 = vdwg.mxu0
  %v347 = vmax.f32 %v270, 0.0
  %v348 = vmax.f32 %v299, 0.0
  %v349 = vmax.f32 %v328, 0.0
  %v350 = vmax.f32 %v272, 0.0
  %v351 = vmax.f32 %v301, 0.0
  %v352 = vmax.f32 %v330, 0.0
  %v353 = vmax.f32 %v275, 0.0
  %v354 = vmax.f32 %v304, 0.0
  %v355 = vmax.f32 %v333, 0.0
  %v356 = vmax.f32 %v277, 0.0
  %v357 = vmax.f32 %v306, 0.0
  %v358 = vmax.f32 %v335, 0.0
  %v359 = vmax.f32 %v280, 0.0
  %v360 = vmax.f32 %v309, 0.0
  %v361 = vmax.f32 %v338, 0.0
  %v362 = vmax.f32 %v282, 0.0
  %v363 = vmax.f32 %v311, 0.0
  %v364 = vmax.f32 %v340, 0.0
  %v365 = vmax.f32 %v285, 0.0
  %v366 = vmax.f32 %v314, 0.0
  %v367 = vmax.f32 %v343, 0.0
  %v368 = vmax.f32 %v287, 0.0
  %v369 = vmax.f32 %v316, 0.0
  %v370 = vmax.f32 %v345, 0.0
  %v371 = vld [vmem:[%s3] sm:$0xf]
  %v372 = vld [vmem:[%s3 + $0x4] sm:$0xf]
  %v373 = vld [vmem:[%s3 + $0x8] sm:$0xf]
  %v374 = vld [vmem:[%s3 + $0xc] sm:$0xf]
  %v375 = vpack.c.bf16 %v350, %v347
  %v376 = vpack.c.bf16 %v351, %v348
  %v377 = vpack.c.bf16 %v352, %v349
  %v378 = vpack.c.bf16 %v356, %v353
  %v379 = vpack.c.bf16 %v357, %v354
  %v380 = vpack.c.bf16 %v358, %v355
  %v381 = vpack.c.bf16 %v362, %v359
  %v382 = vpack.c.bf16 %v363, %v360
  %v383 = vpack.c.bf16 %v364, %v361
  %v384 = vpack.c.bf16 %v368, %v365
  %v385 = vpack.c.bf16 %v369, %v366
  %v386 = vpack.c.bf16 %v370, %v367
  %v387 = vld [vmem:[%s4] sm:$0xff]
  %v388 = vld [vmem:[%s4 + $0x8] sm:$0xff]
  %v389 = vld [vmem:[%s4 + $0x10] sm:$0xff]
  %v390 = vld [vmem:[%s4 + $0x18] sm:$0xff]
  %392 = vset.pattern.permute.xlu0 0
  %393 = vperm.xlu0 %392, %v387
  %v394 = vpop.permute.xlu0 %393
  %397 = vset.pattern.permute.xlu0 0
  %398 = vperm.xlu0 %397, %v388
  %v399 = vpop.permute.xlu0 %398
  %402 = vset.pattern.permute.xlu0 0
  %403 = vperm.xlu0 %402, %v389
  %v404 = vpop.permute.xlu0 %403
  %407 = vset.pattern.permute.xlu0 0
  %408 = vperm.xlu0 %407, %v390
  %v409 = vpop.permute.xlu0 %408
  %v415 = vunpack.c.l.b16 %v371
  %v416 = vunpack.c.l.b16 %v372
  %v417 = vunpack.c.l.b16 %v373
  %v418 = vunpack.c.l.b16 %v374
  %v419 = vpack.c.b16 %v416, %v415
  %v420 = vpack.c.b16 %v418, %v417
  %vm421 = vcmask 523264
  %v423 = vsel %vm421, %v419, 0
  %v426 = vsel %vm421, %v420, 0
  %428 = vmatpush.bf16.msra.mxu0 0
  %429 = vmatpush.bf16.msra.mxu0 0
  %430 = vmatpush.bf16.msra.mxu0 0
  %431 = vmatpush.bf16.msra.mxu0 0
  %432 = vmatpush.bf16.msra.mxu0 %v384
  %433 = vmatpush.bf16.msra.mxu0 %v381
  %434 = vmatpush.bf16.msra.mxu0 %v378
  %435 = vmatpush.bf16.msra.mxu0 %v375
  %436 = vmatmul.bf16.gmra.mxu0 %v423
  %v437 = vpop.f32.mrf.mxu0
  %v438 = vadd.f32 %v394, %v437
  %v439 = vpop.f32.mrf.mxu0
  %v440 = vadd.f32 %v399, %v439
  %441 = vmatmul.bf16.gmra.mxu0 %v426
  %v442 = vpop.f32.mrf.mxu0
  %v443 = vadd.f32 %v404, %v442
  %v444 = vpop.f32.mrf.mxu0
  %v445 = vadd.f32 %v409, %v444
  %446 = vdwg.mxu0
  %447 = vmatpush.bf16.msra.mxu0 0
  %448 = vmatpush.bf16.msra.mxu0 0
  %449 = vmatpush.bf16.msra.mxu0 0
  %450 = vmatpush.bf16.msra.mxu0 0
  %451 = vmatpush.bf16.msra.mxu0 %v385
  %452 = vmatpush.bf16.msra.mxu0 %v382
  %453 = vmatpush.bf16.msra.mxu0 %v379
  %454 = vmatpush.bf16.msra.mxu0 %v376
  %455 = vmatmul.bf16.gmra.mxu0 %v423
  %v456 = vpop.f32.mrf.mxu0
  %v457 = vadd.f32 %v394, %v456
  %v458 = vpop.f32.mrf.mxu0
  %v459 = vadd.f32 %v399, %v458
  %460 = vmatmul.bf16.gmra.mxu0 %v426
  %v461 = vpop.f32.mrf.mxu0
  %v462 = vadd.f32 %v404, %v461
  %v463 = vpop.f32.mrf.mxu0
  %v464 = vadd.f32 %v409, %v463
  %465 = vdwg.mxu0
  %466 = vmatpush.bf16.msra.mxu0 0
  %467 = vmatpush.bf16.msra.mxu0 0
  %468 = vmatpush.bf16.msra.mxu0 0
  %469 = vmatpush.bf16.msra.mxu0 0
  %470 = vmatpush.bf16.msra.mxu0 %v386
  %471 = vmatpush.bf16.msra.mxu0 %v383
  %472 = vmatpush.bf16.msra.mxu0 %v380
  %473 = vmatpush.bf16.msra.mxu0 %v377
  %474 = vmatmul.bf16.gmra.mxu0 %v423
  %v475 = vpop.f32.mrf.mxu0
  %v476 = vadd.f32 %v394, %v475
  %v477 = vpop.f32.mrf.mxu0
  %v478 = vadd.f32 %v399, %v477
  %479 = vmatmul.bf16.gmra.mxu0 %v426
  %v480 = vpop.f32.mrf.mxu0
  %v481 = vadd.f32 %v404, %v480
  %v482 = vpop.f32.mrf.mxu0
  %v483 = vadd.f32 %v409, %v482
  %484 = vdwg.mxu0
  %v485 = vmax.f32 %v438, 0.0
  %v486 = vmax.f32 %v457, 0.0
  %v487 = vmax.f32 %v476, 0.0
  %v488 = vmax.f32 %v440, 0.0
  %v489 = vmax.f32 %v459, 0.0
  %v490 = vmax.f32 %v478, 0.0
  %v491 = vmax.f32 %v443, 0.0
  %v492 = vmax.f32 %v462, 0.0
  %v493 = vmax.f32 %v481, 0.0
  %v494 = vmax.f32 %v445, 0.0
  %v495 = vmax.f32 %v464, 0.0
  %v496 = vmax.f32 %v483, 0.0
  %v497 = vld [vmem:[%s5] sm:$0xf]
  %v498 = vpack.c.bf16 %v488, %v485
  %v499 = vpack.c.bf16 %v489, %v486
  %v500 = vpack.c.bf16 %v490, %v487
  %v501 = vpack.c.bf16 %v494, %v491
  %v502 = vpack.c.bf16 %v495, %v492
  %v503 = vpack.c.bf16 %v496, %v493
  %v504 = vld [vmem:[%s6] sm:$0xff]
  %506 = vset.pattern.permute.xlu0 0
  %507 = vperm.xlu0 %506, %v504
  %v508 = vpop.permute.xlu0 %507
  %vm510 = vcmask 261120
  %v512 = vsel %vm510, %v497, 0
  %514 = vmatpush.bf16.msra.mxu0 0
  %515 = vmatpush.bf16.msra.mxu0 0
  %516 = vmatpush.bf16.msra.mxu0 0
  %517 = vmatpush.bf16.msra.mxu0 0
  %518 = vmatpush.bf16.msra.mxu0 0
  %519 = vmatpush.bf16.msra.mxu0 0
  %520 = vmatpush.bf16.msra.mxu0 %v501
  %521 = vmatpush.bf16.msra.mxu0 %v498
  %522 = vmatmul.bf16.gmra.mxu0 %v512
  %v523 = vpop.f32.mrf.mxu0
  %v524 = vadd.f32 %v508, %v523
  %v525 = vpop.f32.mrf.mxu0
  %526 = vdwg.mxu0
  %527 = vmatpush.bf16.msra.mxu0 0
  %528 = vmatpush.bf16.msra.mxu0 0
  %529 = vmatpush.bf16.msra.mxu0 0
  %530 = vmatpush.bf16.msra.mxu0 0
  %531 = vmatpush.bf16.msra.mxu0 0
  %532 = vmatpush.bf16.msra.mxu0 0
  %533 = vmatpush.bf16.msra.mxu0 %v502
  %534 = vmatpush.bf16.msra.mxu0 %v499
  %535 = vmatmul.bf16.gmra.mxu0 %v512
  %v536 = vpop.f32.mrf.mxu0
  %v537 = vadd.f32 %v508, %v536
  %v538 = vpop.f32.mrf.mxu0
  %539 = vdwg.mxu0
  %540 = vmatpush.bf16.msra.mxu0 0
  %541 = vmatpush.bf16.msra.mxu0 0
  %542 = vmatpush.bf16.msra.mxu0 0
  %543 = vmatpush.bf16.msra.mxu0 0
  %544 = vmatpush.bf16.msra.mxu0 0
  %545 = vmatpush.bf16.msra.mxu0 0
  %546 = vmatpush.bf16.msra.mxu0 %v503
  %547 = vmatpush.bf16.msra.mxu0 %v500
  %548 = vmatmul.bf16.gmra.mxu0 %v512
  %v549 = vpop.f32.mrf.mxu0
  %v550 = vadd.f32 %v508, %v549
  %v551 = vpop.f32.mrf.mxu0
  %552 = vdwg.mxu0
  %553 = vst [vmem:[%s7] sm:$0xff] %v524
  %554 = vst [vmem:[%s7 + $0x8] sm:$0xff] %v537
  %555 = vst [vmem:[%s7 + $0x10] sm:$0xff] %v550
  // Predicated region
  $region30: #{heightnet_forward.1} parent=0 // pred_check
    _
  $region31: #{heightnet_forward.1} parent=0 // pred_check_branch
    %557 = sbr.rel (0) target = $region33
  $region32: #{heightnet_forward.1} parent=0 // pred_region
    _
  $region33: #{heightnet_forward.1} parent=0 // pred_fallthru
    _
  // Predicated region
  $region34: #{heightnet_forward.1} parent=0 // pred_check
    _
  $region35: #{heightnet_forward.1} parent=0 // pred_check_branch
    %559 = sbr.rel (0) target = $region37
  $region36: #{heightnet_forward.1} parent=0 // pred_region
    _
  $region37: #{heightnet_forward.1} parent=0 // pred_fallthru
    _

</llo_original>
